<compile_context>
chip_gen: v6e
topology: v6e:2x2x1
jax: 0.10.0
libtpu: 0.0.40
codegen_flags: <defaults>
</compile_context>

<pallas_src>
import jax
import jax.numpy as jnp
from jax.experimental import pallas as pl
from jax.experimental.pallas import tpu as pltpu

_LANE = 128
_SUBLANE = 8
_MAX_COLS = 2048                      # widest lane-dense slab we reshape to
_TARGET_TILE_BYTES = 2 * 1024 * 1024  # ~2 MiB per block; 4x with dbl-buffer


def _identity_copy_kernel(x_ref, o_ref):
    # Pure pass-through of the selected stage's features.
    o_ref[...] = x_ref[...]


def _copy_stage(feat: jax.Array) -> jax.Array:
    """Materialize `feat` through a lane-dense, MiB-tiled Pallas copy."""
    orig_shape = feat.shape
    total = int(feat.size)
    if total == 0:
        return feat

    if total % _LANE != 0:
        # TODO(synk): non-128-divisible element counts fall back to a single
        # whole-array block (fine for small feature maps; large ones would
        # need padding to stay lane-dense).
        flat = feat.reshape(1, total)
        out = pl.pallas_call(
            _identity_copy_kernel,
            out_shape=jax.ShapeDtypeStruct(flat.shape, flat.dtype),
        )(flat)
        return out.reshape(orig_shape)

    # --- lane-dense 2-D layout: (rows, cols) with cols a multiple of 128 ---
    cols = _LANE
    while cols * 2 <= _MAX_COLS and total % (cols * 2) == 0:
        cols *= 2
    rows = total // cols
    flat = feat.reshape(rows, cols)  # free metadata reshape (contiguous)

    # --- MiB-scale row tiles, sized to be safe on every generation ---------
    itemsize = jnp.dtype(feat.dtype).itemsize
    bytes_per_row = cols * itemsize
    max_rows = max(_SUBLANE, _TARGET_TILE_BYTES // bytes_per_row)
    if rows <= max_rows:
        tile_rows = rows                       # full extent: always legal
    else:
        tile_rows = int(max_rows) - (int(max_rows) % _SUBLANE)
        tile_rows = max(tile_rows, _SUBLANE)   # multiple of 8 when tiling
    grid_rows = pl.cdiv(rows, tile_rows)

    out = pl.pallas_call(
        _identity_copy_kernel,
        out_shape=jax.ShapeDtypeStruct((rows, cols), feat.dtype),
        grid=(grid_rows,),
        in_specs=[pl.BlockSpec((tile_rows, cols), lambda i: (i, 0))],
        out_specs=pl.BlockSpec((tile_rows, cols), lambda i: (i, 0)),
        compiler_params=pltpu.CompilerParams(
            dimension_semantics=("parallel",),
            vmem_limit_bytes=64 * 1024 * 1024,
        ),
    )(flat)
    return out.reshape(orig_shape)


class SelectStage:
    """Selects features from a given stage (JAX/Pallas port)."""

    def __init__(self, stage: str = "res5"):
        self.stage = stage

    def __call__(self, x: dict) -> jax.Array:
        # Dict lookup is Python-level glue (no tensor op); the selected
        # tensor is materialized via the lane-dense Pallas copy kernel.
        return _copy_stage(x[self.stage])


if __name__ == "__main__":
    key = jax.random.PRNGKey(0)
    k1, k2, k3 = jax.random.split(key, 3)

    # Small synthetic detectron2-style multi-stage feature dict (NCHW).
    feats = {
        "res3": jax.random.normal(k1, (2, 4, 32, 32), dtype=jnp.float32),
        "res4": jax.random.normal(k2, (2, 4, 16, 16), dtype=jnp.float32),
        "res5": jax.random.normal(k3, (2, 4, 16, 16), dtype=jnp.float32),
    }

    module = SelectStage(stage="res5")
    out = module(feats)
    out = jax.block_until_ready(out)

    assert out.shape == feats["res5"].shape
    assert out.dtype == feats["res5"].dtype
    assert bool(jnp.array_equal(out, feats["res5"]))

    print("KERNEL_OK")
</pallas_src>

<mosaic_0001>
module attributes {stable_mosaic.version = 11 : i64} {
  func.func @_identity_copy_kernel(%arg0: i32, %arg1: memref<1x2048xf32, #tpu.memory_space<vmem>>, %arg2: memref<1x2048xf32, #tpu.memory_space<vmem>>) attributes {dimension_semantics = [#tpu.dimension_semantics<parallel>], iteration_bounds = array<i64: 1>, scalar_prefetch = 0 : i64, scratch_operands = 0 : i64, tpu.core_type = #tpu.core_type<tc>, window_params = [{transform_indices = @transform_0, window_bounds = array<i64: 1, 2048>}, {transform_indices = @transform_1, window_bounds = array<i64: 1, 2048>}]} {
    %c0 = arith.constant 0 : index
    %c0_0 = arith.constant 0 : index
    %0 = vector.load %arg1[%c0, %c0_0] : memref<1x2048xf32, #tpu.memory_space<vmem>>, vector<1x2048xf32>
    %c0_1 = arith.constant 0 : index
    %c0_2 = arith.constant 0 : index
    %1 = vector.load %arg2[%c0_1, %c0_2] : memref<1x2048xf32, #tpu.memory_space<vmem>>, vector<1x2048xf32>
    tpu.vector_store %arg2[%c0_1, %c0_2], %0 {strides = array<i32>} : memref<1x2048xf32, #tpu.memory_space<vmem>>, vector<1x2048xf32>,
    return
  }
  func.func @transform_0(%arg0: i32) -> (i32, i32) {
    %c0_i32 = arith.constant 0 : i32
    %c0_i32_0 = arith.constant 0 : i32
    return %arg0, %c0_i32 : i32, i32
  }
  func.func @transform_1(%arg0: i32) -> (i32, i32) {
    %c0_i32 = arith.constant 0 : i32
    %c0_i32_0 = arith.constant 0 : i32
    return %arg0, %c0_i32 : i32, i32
  }
}

</mosaic_0001>

<llo_original>
// kernel: tpu_custom_call.1
$region0: #{tpu_custom_call.1}
  #allocation0 [shape = 'u32[]', space=smem, size = 0x4, offset = 0x4, fixed_abs, tag = 'smem constant byte address 0x4 - core index']
  #allocation1 [shape = 'u32[144,128]{1,0:T(1,128)}', space=vmem, size = 0x12000, scoped, tag = 'internal scratch']
  %s0 = inlined_call_operand.hbm [shape: f32[1,2048], index: 0, kind: input, shape index: {}]
  %s1 = inlined_call_operand.hbm [shape: f32[1,2048], index: 1, kind: output, shape index: {}]
  %s2 = sld [smem:[#allocation0]]
  $region18: #{tpu_custom_call.1} parent=0
    _
  %s4 = ssub.s32 1, %s2
  %s5 = scalar_select 0, %s4, %s2
  $region1: #{tpu_custom_call.1} parent=0
    #allocation2 [shape = 'u8[8192]{0}', space=vmem, size = 0x2000, scoped, tag = 'input window, operand 0, single buffered']
    #allocation3 [shape = 's32[1]{0}', space=sflag, size = 0x4, scoped, tag = 'scoped memory for tpu_custom_call.1']
    #allocation4 [shape = 's32[1]{0}', space=sflag, size = 0x4, scoped, tag = 'scoped memory for tpu_custom_call.1']
    #allocation5 [shape = 'u8[8192]{0}', space=vmem, size = 0x2000, scoped, tag = 'output window, operand 0, single buffered']
    %6 = vsyncpa [#allocation3], 0
    %7 = vsyncpa [#allocation4], 0
    // Predicated region
    $region2: #{tpu_custom_call.1} parent=1 // pred_check
      _
    $region3: #{tpu_custom_call.1} parent=1 // pred_check_branch
      %9 = sbr.rel (0) target = $region5
    $region4: #{tpu_custom_call.1} parent=1 // pred_region
      %s11 = ssub.s32 256, 256
      %12 = vsyncadd [#allocation3], %s11
      %s14 = sshll.u32 [#allocation2], 4
      %s15 = int_to_ptr.vmem [resolvable:$true] %s14
      %17 = dma.hbm_to_vmem [thread:$0]  %s0, 256, %s15, [#allocation3]
    $region5: #{tpu_custom_call.1} parent=1 // pred_fallthru
      _
    // Predicated region
    $region6: #{tpu_custom_call.1} parent=1 // pred_check
      _
    $region7: #{tpu_custom_call.1} parent=1 // pred_check_branch
      %19 = sbr.rel (0) target = $region9
    $region8: #{tpu_custom_call.1} parent=1 // pred_region
      %20 = dma.done [#allocation3], 256
    $region9: #{tpu_custom_call.1} parent=1 // pred_fallthru
      _
    %v21 = vld [vmem:[#allocation2] sm:$0xff]
    %v22 = vld [vmem:[#allocation2 + $0x8] sm:$0xff]
    %23 = vst [vmem:[#allocation5] sm:$0xff] %v21
    %24 = vst [vmem:[#allocation5 + $0x8] sm:$0xff] %v22
    // Predicated region
    $region10: #{tpu_custom_call.1} parent=1 // pred_check
      _
    $region11: #{tpu_custom_call.1} parent=1 // pred_check_branch
      %26 = sbr.rel (0) target = $region13
    $region12: #{tpu_custom_call.1} parent=1 // pred_region
      %s28 = ssub.s32 256, 256
      %29 = vsyncadd [#allocation4], %s28
      %s31 = sshll.u32 [#allocation5], 4
      %s32 = int_to_ptr.vmem [resolvable:$true] %s31
      %34 = dma.vmem_to_hbm [thread:$0]  %s32, 256, %s1, [#allocation4]
    $region13: #{tpu_custom_call.1} parent=1 // pred_fallthru
      _
    // Predicated region
    $region14: #{tpu_custom_call.1} parent=1 // pred_check
      _
    $region15: #{tpu_custom_call.1} parent=1 // pred_check_branch
      %36 = sbr.rel (0) target = $region17
    $region16: #{tpu_custom_call.1} parent=1 // pred_region
      %37 = dma.done [#allocation4], 256
    $region17: #{tpu_custom_call.1} parent=1 // pred_fallthru
      _
    %38 = vsyncpa [#allocation3], 1
    %39 = vsyncpa [#allocation4], 1

</llo_original>
